<compile_context>
chip_gen: v7x
topology: tpu7x:2x2x1
jax: 0.10.0
libtpu: 0.0.40
codegen_flags: <defaults>
</compile_context>

<pallas_src>
import functools

import numpy as np
import jax
import jax.numpy as jnp
from jax.experimental import pallas as pl
from jax.experimental.pallas import tpu as pltpu


def _round_up(x, m):
    return (x + m - 1) // m * m


# ----------------------------------------------------------------------------
# Static per-level location / signed-stride table (numpy -> compile-time const)
# ----------------------------------------------------------------------------
def _level_table_np(h, w, s):
    """Rows 0..3: [x, y, x, y] anchor centers in row-major (iy*w+ix) flatten
    order (exact re-index of the reference _locations_per_level ordering),
    rows 4..7: signed stride [-s, -s, +s, +s]."""
    ix = np.arange(w, dtype=np.float32)
    iy = np.arange(h, dtype=np.float32)
    xs = s / 2.0 + ix * s
    ys = s / 2.0 + iy * s
    # reference ordering: [(y, x) for x in xs for y in ys] -> index = ix*h + iy
    yy = np.tile(ys, w)
    xx = np.repeat(xs, h)
    loc = np.stack([yy, xx], axis=1)                      # (w*h, 2) entries (y, x)
    j = np.arange(h * w)
    perm = (j % w) * h + (j // w)                         # row-major re-index
    lrm = loc[perm]
    loc4 = np.stack([lrm[:, 1], lrm[:, 0], lrm[:, 1], lrm[:, 0]], axis=0)
    sgn = np.array([-1.0, -1.0, 1.0, 1.0], np.float32)[:, None] * float(s)
    ss = np.broadcast_to(sgn, (4, h * w))
    return np.concatenate([loc4, ss], axis=0).astype(np.float32)     # (8, h*w)


# ----------------------------------------------------------------------------
# Fused Pallas kernel: merged 1x1-conv head + scoring + argmax + box decode.
#   x_ref  : (C, T)      feature rows for one (batch, row-tile) grid cell
#   w_ref  : (F, C)      merged head weight (F = K cls + 4 reg + 1 ctr)
#   b_ref  : (F, 1)      merged head bias
#   tab_ref: (8, T)      rows 0-3 [x,y,x,y] locations, rows 4-7 signed stride
#   out_ref: (8, T)      rows 0-3 boxes, 4 thresholded max score, 5 class id,
#                        6-7 zero padding (sublane-dense packed output)
# ----------------------------------------------------------------------------
def _fused_head_decode_kernel(x_ref, w_ref, b_ref, tab_ref, out_ref, *,
                              num_classes, t_valid, clip_w, clip_h,
                              pre_nms_thresh):
    x = x_ref[...]                                        # (C, T)
    w = w_ref[...]                                        # (F, C)
    b = b_ref[...]                                        # (F, 1)
    c_in = x.shape[0]
    tile_t = x.shape[1]
    k = num_classes

    # Shared 1x1-conv head for all F outputs in ONE pass over x.
    if c_in <= 16:
        # Tiny contraction: unrolled VPU broadcast-FMAs (MXU would be ~0% used).
        acc = b + w[:, 0:1] * x[0:1, :]
        for c in range(1, c_in):
            acc = acc + w[:, c:c + 1] * x[c:c + 1, :]
    else:
        acc = jnp.dot(w, x, preferred_element_type=jnp.float32) + b  # (F, T)

    cls_logits = acc[0:k, :]                              # (K, T)
    reg_logits = acc[k:k + 4, :]                          # (4, T)
    ctr_logit = acc[k + 4:k + 5, :]                       # (1, T)

    scores = jax.nn.sigmoid(cls_logits) * jax.nn.sigmoid(ctr_logit)   # (K, T)
    max_s = jnp.max(scores, axis=0, keepdims=True)                    # (1, T)

    # argmax over classes (first occurrence of the max); FCOS labels start at 1.
    row = jax.lax.broadcasted_iota(jnp.int32, scores.shape, 0)
    cls_idx = jnp.min(jnp.where(scores == max_s, row, k), axis=0, keepdims=True)
    cls_id = cls_idx.astype(jnp.float32) + 1.0

    # pre-NMS threshold + mask padded tail columns so they never win top_k.
    max_s = jnp.where(max_s > pre_nms_thresh, max_s, 0.0)
    col = pl.program_id(1) * tile_t + jax.lax.broadcasted_iota(
        jnp.int32, (1, tile_t), 1)
    max_s = jnp.where(col < t_valid, max_s, -1.0)

    # FCOS-style decode: exp/clip regression * signed stride (synthetic glue);
    # sign and per-level stride are pre-folded into tab rows 4-7.
    reg = jnp.exp(jnp.clip(reg_logits, -4.0, 4.0))
    boxes = tab_ref[0:4, :] + tab_ref[4:8, :] * reg
    crow = jax.lax.broadcasted_iota(jnp.int32, (4, tile_t), 0)
    clip_hi = jnp.where(crow % 2 == 1, jnp.float32(clip_h), jnp.float32(clip_w))
    boxes = jnp.clip(boxes, 0.0, clip_hi)

    out_ref[0:4, :] = boxes
    out_ref[4:5, :] = max_s
    out_ref[5:6, :] = cls_id
    out_ref[6:8, :] = jnp.zeros((2, tile_t), jnp.float32)


# ----------------------------------------------------------------------------
# Input preparation: synthetic FPN features + concatenated-level row table
# ----------------------------------------------------------------------------
def _prepare_inputs(images, params, num_classes, fpn_strides, tile_t=None):
    N, C, H, W = images.shape
    K = num_classes
    F = K + 4 + 1
    assert params["w"].shape == (C, F) and params["b"].shape == (1, F)

    # TODO(synk): real backbone / FPN ("self.model") not provided; replaced by a
    # deterministic hierarchical stride-avg-pool + shared 1x1-conv head.
    x_parts, tab_parts = [], []
    prev_feat, prev_s = images, 1
    for s in fpn_strides:
        if s >= prev_s and s % prev_s == 0:
            src, r = prev_feat, s // prev_s               # pool from previous level
        else:
            src, r = images, s                            # fallback: pool from image
        h, w = src.shape[2] // r, src.shape[3] // r
        f = src.reshape(N, C, h, r, w, r).mean(axis=(3, 5))      # (N, C, h, w)
        prev_feat, prev_s = f, s
        x_parts.append(f.reshape(N, C, h * w))
        tab_parts.append(_level_table_np(h, w, s))

    x_cat = jnp.concatenate(x_parts, axis=2)              # (N, C, T)
    tab = np.concatenate(tab_parts, axis=1)               # (8, T) compile-time const
    T = x_cat.shape[2]

    # Tile selection: one block per batch; keep >=2 grid cells for v7x megacore.
    if tile_t is None:
        n_tiles = 1 if N >= 2 else 2
        tile_t = _round_up((T + n_tiles - 1) // n_tiles, 128)
    else:
        tile_t = _round_up(min(tile_t, _round_up(T, 128)), 128)
    T_pad = _round_up(T, tile_t)

    if T_pad != T:
        x_cat = jnp.pad(x_cat, ((0, 0), (0, 0), (0, T_pad - T)))
        tab = np.pad(tab, ((0, 0), (0, T_pad - T)))

    return dict(
        x=x_cat, tab=jnp.asarray(tab),
        w=params["w"].T, b=params["b"].T,                 # (F, C), (F, 1)
        T=T, T_pad=T_pad, tile_t=tile_t,
        N=N, C=C, K=K, F=F,
        clip_w=float(W - 1), clip_h=float(H - 1),
    )


# ----------------------------------------------------------------------------
# Single fused pallas_call over all FPN levels
# ----------------------------------------------------------------------------
def fused_head_decode(prep, pre_nms_thresh):
    N, C, K, F = prep["N"], prep["C"], prep["K"], prep["F"]
    T_pad, tile_t = prep["T_pad"], prep["tile_t"]
    grid = (N, T_pad // tile_t)
    const = lambda n, t: (0, 0)
    kernel = functools.partial(
        _fused_head_decode_kernel,
        num_classes=K, t_valid=prep["T"],
        clip_w=prep["clip_w"], clip_h=prep["clip_h"],
        pre_nms_thresh=float(pre_nms_thresh),
    )
    return pl.pallas_call(
        kernel,
        out_shape=jax.ShapeDtypeStruct((N, 8, T_pad), jnp.float32),
        grid=grid,
        in_specs=[
            pl.BlockSpec((None, C, tile_t), lambda n, t: (n, 0, t)),   # features
            pl.BlockSpec((F, C), const),                               # merged weight
            pl.BlockSpec((F, 1), const),                               # merged bias
            pl.BlockSpec((8, tile_t), lambda n, t: (0, t)),            # loc + stride
        ],
        out_specs=pl.BlockSpec((None, 8, tile_t), lambda n, t: (n, 0, t)),
        compiler_params=pltpu.CompilerParams(
            dimension_semantics=("parallel", "parallel")),
    )(prep["x"], prep["w"], prep["b"], prep["tab"])


def fused_head_decode_reference(prep, pre_nms_thresh):
    """Pure-jnp reference of the fused kernel (for correctness checking)."""
    x, tab = prep["x"], prep["tab"]
    K, T, T_pad = prep["K"], prep["T"], prep["T_pad"]
    logits = jnp.einsum("fc,nct->nft", prep["w"], x) + prep["b"][None]
    cls_l, reg_l, ctr_l = logits[:, :K], logits[:, K:K + 4], logits[:, K + 4:K + 5]
    scores = jax.nn.sigmoid(cls_l) * jax.nn.sigmoid(ctr_l)
    max_s = jnp.max(scores, axis=1, keepdims=True)
    cls_id = jnp.argmax(scores, axis=1, keepdims=True).astype(jnp.float32) + 1.0
    max_s = jnp.where(max_s > pre_nms_thresh, max_s, 0.0)
    col = jnp.arange(T_pad)[None, None, :]
    max_s = jnp.where(col < T, max_s, -1.0)
    clip_hi = jnp.array([prep["clip_w"], prep["clip_h"]] * 2,
                        jnp.float32).reshape(1, 4, 1)
    boxes = jnp.clip(tab[None, 0:4] + tab[None, 4:8]
                     * jnp.exp(jnp.clip(reg_l, -4.0, 4.0)), 0.0, clip_hi)
    zeros = jnp.zeros((x.shape[0], 2, T_pad), jnp.float32)
    return jnp.concatenate([boxes, max_s, cls_id, zeros], axis=1)


# ----------------------------------------------------------------------------
# FCOSPredictor.forward (inference path; targets_batch is None)
# ----------------------------------------------------------------------------
def fcos_predictor_forward(
    images,
    params,
    num_classes,
    fpn_strides,
    pre_nms_thresh=0.3,
    fpn_post_nms_top_n=50,
    tile_t=None,
):
    prep = _prepare_inputs(images, params, num_classes, fpn_strides, tile_t)
    packed = fused_head_decode(prep, pre_nms_thresh)       # (N, 8, T_pad)

    boxes_all = packed[:, 0:4, :]                          # (N, 4, T_pad)
    max_scores = packed[:, 4, :]                           # (N, T_pad), pad cols = -1
    cls_all = packed[:, 5, :]                              # (N, T_pad)

    k = min(fpn_post_nms_top_n, prep["T"])
    top_scores, top_idx = jax.lax.top_k(max_scores, k)
    predicted_boxes = jnp.take_along_axis(boxes_all, top_idx[:, None, :], axis=2)
    predicted_boxes = jnp.transpose(predicted_boxes, (0, 2, 1))        # (N, k, 4)
    pred_classes = jnp.take_along_axis(cls_all, top_idx, axis=1).astype(jnp.int32)
    top_scores = jnp.maximum(top_scores, 0.0)              # guard padded (-1) columns

    # TODO(synk): per-class NMS (data-dependent sequential suppression) and the
    # LossEvaluator training branch (targets_batch) were not provided and have
    # no clean Pallas equivalent; only threshold + top-k selection is done here.
    return {
        "predicted_boxes": predicted_boxes,   # (N, k, 4)
        "scores": top_scores,                 # (N, k)
        "pred_classes": pred_classes,         # (N, k)
    }


# ----------------------------------------------------------------------------
if __name__ == "__main__":
    key = jax.random.PRNGKey(0)
    k_img, k_w, k_b = jax.random.split(key, 3)

    N, C, H, W = 2, 4, 128, 128
    num_classes = 6
    fpn_strides = [8, 16, 32]
    fpn_post_nms_top_n = 50

    images = jax.random.normal(k_img, (N, C, H, W), dtype=jnp.float32)

    F = num_classes + 4 + 1
    params = {
        "w": 0.5 * jax.random.normal(k_w, (C, F), dtype=jnp.float32),
        "b": 0.1 * jax.random.normal(k_b, (1, F), dtype=jnp.float32),
    }

    # Correctness: fused Pallas kernel vs pure-jnp reference.
    prep = _prepare_inputs(images, params, num_classes, fpn_strides)
    packed_k = jax.block_until_ready(fused_head_decode(prep, 0.3))
    packed_r = fused_head_decode_reference(prep, 0.3)
    assert bool(jnp.allclose(packed_k[:, 0:4], packed_r[:, 0:4],
                             rtol=1e-3, atol=1e-2))                    # boxes
    max_ok = jnp.abs(packed_k[:, 4] - packed_r[:, 4]) <= 1e-3          # max score
    assert float(jnp.mean(max_ok.astype(jnp.float32))) > 0.999
    cls_ok = packed_k[:, 5] == packed_r[:, 5]                          # class ids
    assert float(jnp.mean(cls_ok.astype(jnp.float32))) > 0.999

    run = jax.jit(functools.partial(
        fcos_predictor_forward,
        num_classes=num_classes,
        fpn_strides=fpn_strides,
        pre_nms_thresh=0.3,
        fpn_post_nms_top_n=fpn_post_nms_top_n,
    ))
    outputs = jax.block_until_ready(run(images, params))

    assert outputs["predicted_boxes"].shape == (N, fpn_post_nms_top_n, 4)
    assert outputs["scores"].shape == (N, fpn_post_nms_top_n)
    assert outputs["pred_classes"].shape == (N, fpn_post_nms_top_n)
    assert bool(jnp.all(jnp.isfinite(outputs["predicted_boxes"])))
    assert bool(jnp.all(outputs["scores"] >= 0.0))
    assert bool(jnp.all(outputs["pred_classes"] >= 1))
    assert bool(jnp.all(outputs["pred_classes"] <= num_classes))
    print("KERNEL_OK")
</pallas_src>

<mosaic_0001>
module attributes {stable_mosaic.version = 11 : i64} {
  func.func @_fused_head_decode_kernel(%arg0: i32, %arg1: i32, %arg2: memref<1x4x384xf32, #tpu.memory_space<vmem>>, %arg3: memref<11x4xf32, #tpu.memory_space<vmem>>, %arg4: memref<11x1xf32, #tpu.memory_space<vmem>>, %arg5: memref<8x384xf32, #tpu.memory_space<vmem>>, %arg6: memref<1x8x384xf32, #tpu.memory_space<vmem>>) attributes {dimension_semantics = [#tpu.dimension_semantics<parallel>, #tpu.dimension_semantics<parallel>], iteration_bounds = array<i64: 2, 1>, scalar_prefetch = 0 : i64, scratch_operands = 0 : i64, tpu.core_type = #tpu.core_type<tc>, window_params = [{transform_indices = @transform_0, window_bounds = array<i64: 1, 4, 384>}, {pipeline_mode = #tpu.pipeline_mode<synchronous>, transform_indices = @transform_1, window_bounds = array<i64: 11, 4>}, {pipeline_mode = #tpu.pipeline_mode<synchronous>, transform_indices = @transform_2, window_bounds = array<i64: 11, 1>}, {transform_indices = @transform_3, window_bounds = array<i64: 8, 384>}, {transform_indices = @transform_4, window_bounds = array<i64: 1, 8, 384>}]} {
    %c0 = arith.constant 0 : index
    %c0_0 = arith.constant 0 : index
    %c0_1 = arith.constant 0 : index
    %0 = vector.load %arg2[%c0, %c0_0, %c0_1] : memref<1x4x384xf32, #tpu.memory_space<vmem>>, vector<1x4x384xf32>
    %1 = vector.shape_cast %0 : vector<1x4x384xf32> to vector<4x384xf32>
    %c0_2 = arith.constant 0 : index
    %c0_3 = arith.constant 0 : index
    %2 = vector.load %arg3[%c0_2, %c0_3] : memref<11x4xf32, #tpu.memory_space<vmem>>, vector<11x4xf32>
    %c0_4 = arith.constant 0 : index
    %c0_5 = arith.constant 0 : index
    %3 = vector.load %arg4[%c0_4, %c0_5] : memref<11x1xf32, #tpu.memory_space<vmem>>, vector<11x1xf32>
    %4 = vector.extract_strided_slice %2 {offsets = [0, 0], sizes = [11, 1], strides = [1, 1]} : vector<11x4xf32> to vector<11x1xf32>
    %5 = vector.extract_strided_slice %1 {offsets = [0, 0], sizes = [1, 384], strides = [1, 1]} : vector<4x384xf32> to vector<1x384xf32>
    %6 = vector.broadcast %4 : vector<11x1xf32> to vector<11x384xf32>
    %7 = vector.broadcast %5 : vector<1x384xf32> to vector<11x384xf32>
    %8 = arith.mulf %6, %7 : vector<11x384xf32>
    %9 = vector.broadcast %3 : vector<11x1xf32> to vector<11x384xf32>
    %10 = arith.addf %9, %8 : vector<11x384xf32>
    %11 = vector.extract_strided_slice %2 {offsets = [0, 1], sizes = [11, 1], strides = [1, 1]} : vector<11x4xf32> to vector<11x1xf32>
    %12 = vector.extract_strided_slice %1 {offsets = [1, 0], sizes = [1, 384], strides = [1, 1]} : vector<4x384xf32> to vector<1x384xf32>
    %13 = vector.broadcast %11 : vector<11x1xf32> to vector<11x384xf32>
    %14 = vector.broadcast %12 : vector<1x384xf32> to vector<11x384xf32>
    %15 = arith.mulf %13, %14 : vector<11x384xf32>
    %16 = arith.addf %10, %15 : vector<11x384xf32>
    %17 = vector.extract_strided_slice %2 {offsets = [0, 2], sizes = [11, 1], strides = [1, 1]} : vector<11x4xf32> to vector<11x1xf32>
    %18 = vector.extract_strided_slice %1 {offsets = [2, 0], sizes = [1, 384], strides = [1, 1]} : vector<4x384xf32> to vector<1x384xf32>
    %19 = vector.broadcast %17 : vector<11x1xf32> to vector<11x384xf32>
    %20 = vector.broadcast %18 : vector<1x384xf32> to vector<11x384xf32>
    %21 = arith.mulf %19, %20 : vector<11x384xf32>
    %22 = arith.addf %16, %21 : vector<11x384xf32>
    %23 = vector.extract_strided_slice %2 {offsets = [0, 3], sizes = [11, 1], strides = [1, 1]} : vector<11x4xf32> to vector<11x1xf32>
    %24 = vector.extract_strided_slice %1 {offsets = [3, 0], sizes = [1, 384], strides = [1, 1]} : vector<4x384xf32> to vector<1x384xf32>
    %25 = vector.broadcast %23 : vector<11x1xf32> to vector<11x384xf32>
    %26 = vector.broadcast %24 : vector<1x384xf32> to vector<11x384xf32>
    %27 = arith.mulf %25, %26 : vector<11x384xf32>
    %28 = arith.addf %22, %27 : vector<11x384xf32>
    %29 = vector.extract_strided_slice %28 {offsets = [0, 0], sizes = [6, 384], strides = [1, 1]} : vector<11x384xf32> to vector<6x384xf32>
    %30 = vector.extract_strided_slice %28 {offsets = [6, 0], sizes = [4, 384], strides = [1, 1]} : vector<11x384xf32> to vector<4x384xf32>
    %31 = vector.extract_strided_slice %28 {offsets = [10, 0], sizes = [1, 384], strides = [1, 1]} : vector<11x384xf32> to vector<1x384xf32>
    %32 = arith.negf %29 : vector<6x384xf32>
    %33 = math.exp %32 : vector<6x384xf32>
    %cst = arith.constant 1.000000e+00 : f32
    %34 = vector.broadcast %cst : f32 to vector<6x384xf32>
    %35 = arith.addf %34, %33 : vector<6x384xf32>
    %36 = arith.divf %34, %35 : vector<6x384xf32>
    %37 = arith.negf %31 : vector<1x384xf32>
    %38 = math.exp %37 : vector<1x384xf32>
    %cst_6 = arith.constant 1.000000e+00 : f32
    %39 = vector.broadcast %cst_6 : f32 to vector<1x384xf32>
    %40 = arith.addf %39, %38 : vector<1x384xf32>
    %41 = arith.divf %39, %40 : vector<1x384xf32>
    %42 = vector.broadcast %41 : vector<1x384xf32> to vector<6x384xf32>
    %43 = arith.mulf %36, %42 : vector<6x384xf32>
    %cst_7 = arith.constant dense<0xFF800000> : vector<384xf32>
    %44 = vector.multi_reduction <maximumf>, %43, %cst_7 [0] : vector<6x384xf32> to vector<384xf32>
    %45 = vector.shape_cast %44 : vector<384xf32> to vector<1x384xf32>
    %46 = tpu.iota {dimensions = array<i32: 0>} : vector<6x384xi32>
    %47 = vector.broadcast %45 : vector<1x384xf32> to vector<6x384xf32>
    %48 = arith.cmpf oeq, %43, %47 : vector<6x384xf32>
    %c6_i32 = arith.constant 6 : i32
    %49 = vector.broadcast %c6_i32 : i32 to vector<6x384xi32>
    %50 = arith.select %48, %46, %49 : vector<6x384xi1>, vector<6x384xi32>
    %cst_8 = arith.constant dense<2147483647> : vector<384xi32>
    %51 = vector.multi_reduction <minsi>, %50, %cst_8 [0] : vector<6x384xi32> to vector<384xi32>
    %52 = vector.shape_cast %51 : vector<384xi32> to vector<1x384xi32>
    %53 = arith.sitofp %52 : vector<1x384xi32> to vector<1x384xf32>
    %cst_9 = arith.constant 1.000000e+00 : f32
    %54 = vector.broadcast %cst_9 : f32 to vector<1x384xf32>
    %55 = arith.addf %53, %54 : vector<1x384xf32>
    %cst_10 = arith.constant 3.000000e-01 : f32
    %56 = vector.broadcast %cst_10 : f32 to vector<1x384xf32>
    %57 = arith.cmpf ogt, %45, %56 : vector<1x384xf32>
    %cst_11 = arith.constant 0.000000e+00 : f32
    %58 = vector.broadcast %cst_11 : f32 to vector<1x384xf32>
    %59 = arith.select %57, %45, %58 : vector<1x384xi1>, vector<1x384xf32>
    %c384_i32 = arith.constant 384 : i32
    %60 = arith.muli %arg1, %c384_i32 : i32
    %61 = tpu.iota {dimensions = array<i32: 1>} : vector<1x384xi32>
    %62 = vector.broadcast %60 : i32 to vector<1x384xi32>
    %63 = arith.addi %62, %61 : vector<1x384xi32>
    %c336_i32 = arith.constant 336 : i32
    %64 = vector.broadcast %c336_i32 : i32 to vector<1x384xi32>
    %65 = arith.cmpi slt, %63, %64 : vector<1x384xi32>
    %cst_12 = arith.constant -1.000000e+00 : f32
    %66 = vector.broadcast %cst_12 : f32 to vector<1x384xf32>
    %67 = arith.select %65, %59, %66 : vector<1x384xi1>, vector<1x384xf32>
    %cst_13 = arith.constant -4.000000e+00 : f32
    %cst_14 = arith.constant 4.000000e+00 : f32
    %68 = vector.broadcast %cst_13 : f32 to vector<4x384xf32>
    %69 = arith.maximumf %68, %30 : vector<4x384xf32>
    %70 = vector.broadcast %cst_14 : f32 to vector<4x384xf32>
    %71 = arith.minimumf %70, %69 : vector<4x384xf32>
    %72 = math.exp %71 : vector<4x384xf32>
    %c0_15 = arith.constant 0 : index
    %c0_16 = arith.constant 0 : index
    %73 = vector.load %arg5[%c0_15, %c0_16] : memref<8x384xf32, #tpu.memory_space<vmem>>, vector<4x384xf32>
    %c4 = arith.constant 4 : index
    %c0_17 = arith.constant 0 : index
    %74 = vector.load %arg5[%c4, %c0_17] : memref<8x384xf32, #tpu.memory_space<vmem>>, vector<4x384xf32>
    %75 = arith.mulf %74, %72 : vector<4x384xf32>
    %76 = arith.addf %73, %75 : vector<4x384xf32>
    %77 = tpu.iota {dimensions = array<i32: 0>} : vector<4x384xi32>
    %c2_i32 = arith.constant 2 : i32
    %c0_i32 = arith.constant 0 : i32
    %78 = arith.cmpi eq, %c2_i32, %c0_i32 : i32
    %c1_i32 = arith.constant 1 : i32
    %79 = arith.select %78, %c1_i32, %c2_i32 : i32
    %80 = vector.broadcast %79 : i32 to vector<4x384xi32>
    %81 = arith.remsi %77, %80 : vector<4x384xi32>
    %c0_i32_18 = arith.constant 0 : i32
    %82 = vector.broadcast %c0_i32_18 : i32 to vector<4x384xi32>
    %83 = arith.cmpi ne, %81, %82 : vector<4x384xi32>
    %c0_i32_19 = arith.constant 0 : i32
    %84 = vector.broadcast %c0_i32_19 : i32 to vector<4x384xi32>
    %85 = arith.cmpi slt, %81, %84 : vector<4x384xi32>
    %c0_i32_20 = arith.constant 0 : i32
    %86 = arith.cmpi slt, %79, %c0_i32_20 : i32
    %87 = vector.broadcast %86 : i1 to vector<4x384xi1>
    %88 = vector.broadcast %87 : vector<4x384xi1> to vector<4x384xi1>
    %89 = arith.xori %85, %88 : vector<4x384xi1>
    %90 = arith.andi %89, %83 : vector<4x384xi1>
    %91 = vector.broadcast %79 : i32 to vector<4x384xi32>
    %92 = arith.addi %81, %91 : vector<4x384xi32>
    %93 = arith.select %90, %92, %81 : vector<4x384xi1>, vector<4x384xi32>
    %c1_i32_21 = arith.constant 1 : i32
    %94 = vector.broadcast %c1_i32_21 : i32 to vector<4x384xi32>
    %95 = arith.cmpi eq, %93, %94 : vector<4x384xi32>
    %cst_22 = arith.constant 1.270000e+02 : f32
    %cst_23 = arith.constant 1.270000e+02 : f32
    %96 = vector.broadcast %cst_22 : f32 to vector<4x384xf32>
    %97 = vector.broadcast %cst_23 : f32 to vector<4x384xf32>
    %98 = arith.select %95, %96, %97 : vector<4x384xi1>, vector<4x384xf32>
    %cst_24 = arith.constant 0.000000e+00 : f32
    %99 = vector.broadcast %cst_24 : f32 to vector<4x384xf32>
    %100 = arith.maximumf %99, %76 : vector<4x384xf32>
    %101 = arith.minimumf %98, %100 : vector<4x384xf32>
    %c0_25 = arith.constant 0 : index
    %c0_26 = arith.constant 0 : index
    %c0_27 = arith.constant 0 : index
    %102 = vector.load %arg6[%c0_25, %c0_26, %c0_27] : memref<1x8x384xf32, #tpu.memory_space<vmem>>, vector<1x4x384xf32>
    %103 = vector.shape_cast %102 : vector<1x4x384xf32> to vector<4x384xf32>
    %104 = vector.shape_cast %101 : vector<4x384xf32> to vector<1x4x384xf32>
    tpu.vector_store %arg6[%c0_25, %c0_26, %c0_27], %104 {strides = array<i32>} : memref<1x8x384xf32, #tpu.memory_space<vmem>>, vector<1x4x384xf32>,
    %c0_28 = arith.constant 0 : index
    %c4_29 = arith.constant 4 : index
    %c0_30 = arith.constant 0 : index
    %105 = vector.load %arg6[%c0_28, %c4_29, %c0_30] : memref<1x8x384xf32, #tpu.memory_space<vmem>>, vector<1x1x384xf32>
    %106 = vector.shape_cast %105 : vector<1x1x384xf32> to vector<1x384xf32>
    %107 = vector.shape_cast %67 : vector<1x384xf32> to vector<1x1x384xf32>
    tpu.vector_store %arg6[%c0_28, %c4_29, %c0_30], %107 {strides = array<i32>} : memref<1x8x384xf32, #tpu.memory_space<vmem>>, vector<1x1x384xf32>,
    %c0_31 = arith.constant 0 : index
    %c5 = arith.constant 5 : index
    %c0_32 = arith.constant 0 : index
    %108 = vector.load %arg6[%c0_31, %c5, %c0_32] : memref<1x8x384xf32, #tpu.memory_space<vmem>>, vector<1x1x384xf32>
    %109 = vector.shape_cast %108 : vector<1x1x384xf32> to vector<1x384xf32>
    %110 = vector.shape_cast %55 : vector<1x384xf32> to vector<1x1x384xf32>
    tpu.vector_store %arg6[%c0_31, %c5, %c0_32], %110 {strides = array<i32>} : memref<1x8x384xf32, #tpu.memory_space<vmem>>, vector<1x1x384xf32>,
    %cst_33 = arith.constant 0.000000e+00 : f32
    %111 = vector.broadcast %cst_33 : f32 to vector<2x384xf32>
    %c0_34 = arith.constant 0 : index
    %c6 = arith.constant 6 : index
    %c0_35 = arith.constant 0 : index
    %112 = vector.load %arg6[%c0_34, %c6, %c0_35] : memref<1x8x384xf32, #tpu.memory_space<vmem>>, vector<1x2x384xf32>
    %113 = vector.shape_cast %112 : vector<1x2x384xf32> to vector<2x384xf32>
    %114 = vector.shape_cast %111 : vector<2x384xf32> to vector<1x2x384xf32>
    tpu.vector_store %arg6[%c0_34, %c6, %c0_35], %114 {strides = array<i32>} : memref<1x8x384xf32, #tpu.memory_space<vmem>>, vector<1x2x384xf32>,
    return
  }
  func.func @transform_0(%arg0: i32, %arg1: i32) -> (i32, i32, i32) {
    %c0_i32 = arith.constant 0 : i32
    %c0_i32_0 = arith.constant 0 : i32
    return %arg0, %c0_i32, %arg1 : i32, i32, i32
  }
  func.func @transform_1(%arg0: i32, %arg1: i32) -> (i32, i32) {
    %c0_i32 = arith.constant 0 : i32
    %c0_i32_0 = arith.constant 0 : i32
    %c0_i32_1 = arith.constant 0 : i32
    return %c0_i32, %c0_i32_0 : i32, i32
  }
  func.func @transform_2(%arg0: i32, %arg1: i32) -> (i32, i32) {
    %c0_i32 = arith.constant 0 : i32
    %c0_i32_0 = arith.constant 0 : i32
    %c0_i32_1 = arith.constant 0 : i32
    return %c0_i32, %c0_i32_0 : i32, i32
  }
  func.func @transform_3(%arg0: i32, %arg1: i32) -> (i32, i32) {
    %c0_i32 = arith.constant 0 : i32
    %c0_i32_0 = arith.constant 0 : i32
    return %c0_i32, %arg1 : i32, i32
  }
  func.func @transform_4(%arg0: i32, %arg1: i32) -> (i32, i32, i32) {
    %c0_i32 = arith.constant 0 : i32
    %c0_i32_0 = arith.constant 0 : i32
    return %arg0, %c0_i32, %arg1 : i32, i32, i32
  }
}

</mosaic_0001>

<llo_original>
// kernel: tpu_custom_call.1
$region0: #{tpu_custom_call.1}
  #allocation0 [shape = 'u32[]', space=smem, size = 0x4, offset = 0x4, fixed_abs, tag = 'smem constant byte address 0x4 - core index']
  #allocation1 [shape = 'u32[144,128]{1,0:T(1,128)}', space=vmem, size = 0x12000, scoped, tag = 'internal scratch']
  %s0 = inlined_call_operand.vmem [shape: f32[2,4,384], index: 0, kind: input, shape index: {}]
  %s1 = inlined_call_operand.vmem [shape: f32[11,4], index: 1, kind: input, shape index: {}]
  %s2 = inlined_call_operand.vmem [shape: f32[11,1], index: 2, kind: input, shape index: {}]
  %s3 = inlined_call_operand.vmem [shape: f32[8,384], index: 3, kind: input, shape index: {}]
  %s4 = inlined_call_operand.hbm [shape: f32[2,8,384], index: 4, kind: output, shape index: {}]
  %s5 = sld [smem:[#allocation0]]
  $region49: #{tpu_custom_call.1} parent=0
    _
  %s7 = ssub.s32 1, %s5
  %s8 = scalar_select 0, %s7, %s5
  $region1: #{tpu_custom_call.1} parent=0
    #allocation2 [shape = 'u8[24576]{0}', space=vmem, size = 0x6000, scoped, tag = 'output window, operand 0']
    #allocation3 [shape = 's32[2]{0}', space=sflag, size = 0x8, scoped, tag = 'scoped memory for tpu_custom_call.1']
    %9 = vsyncpa [#allocation3], 0
    %s10 = scalar_lea.sflag [#allocation3], 1
    %11 = vsyncpa %s10, 0
    loop: start=0, step=1, limit=4
    $region2: #{tpu_custom_call.1} parent=1 // loop_pre_header
      _
    $region3: #{tpu_custom_call.1} parent=1 // loop_header
      %s13 = sphi 0, %s17
      %p14 = scmp.ge.s32.totalorder %s13, 4
      %s20 = sphi 0, %s32
      %s21 = sphi 0, %s28
      %s22 = sphi 0, %s20
      %s23 = sphi 0, %s21
      %s24 = sphi 0, %s22
      %s25 = sphi 0, %s23
      %s37 = sphi 0, %s39
      %s40 = sphi 0, %s37
      %s41 = sphi 0, %s40
      %s57 = sphi 0, %s41
      %s61 = sphi 0, %s61
      %s63 = sphi 0, %s61
      %s64 = sphi 0, %s63
      %s78 = sphi 0, %s64
      %s82 = sphi 0, %s82
      %s84 = sphi 0, %s82
      %s85 = sphi 0, %s84
      %s99 = sphi 0, %s85
      %s105 = sphi 0, %s107
      %s108 = sphi 0, %s105
      %s109 = sphi 0, %s108
      %s125 = sphi 0, %s109
      %s133 = sphi 0, %s135
      %s136 = sphi 0, %s133
      %s137 = sphi 0, %s136
      %s153 = sphi 0, %s137
    $region4: #{tpu_custom_call.1} parent=1 // loop_header_branch
      %16 = sbr.rel (%p14) target = $region8
    $region5: #{tpu_custom_call.1} parent=1 // loop_body
      %s18 = ssub.s32 %s13, 1
      %s19 = ssub.s32 %s13, 2
      %s26 = sadd.s32 1, %s21
      %p27 = scmp.ge.s32.totalorder %s26, 1
      %s28 = scalar_select %p27, 0, %s26
      %s29 = sadd.s32 1, %s20
      %s30 = scalar_select %p27, %s29, %s20
      %p31 = scmp.ge.s32.totalorder %s30, 2
      %s32 = scalar_select %p31, 0, %s30
      %s33 = ssub.s32 %s20, %s32
      %s34 = ssub.s32 %s21, %s28
      %s35 = sor.u32 %s33, %s34
      %p36 = scmp.eq.s32.totalorder %s35, 0
      %s38 = sadd.s32 %s37, 1
      %s39 = scalar_select %p36, %s37, %s38
      %p42 = pneg %p36
      %p43 = scmp.eq.s32.totalorder %s13, 1
      %p44 = por %p42, %p43
      %p45 = scmp.ne.s32.totalorder %s37, %s40
      %p46 = scmp.eq.s32.totalorder %s13, 0
      %p47 = por %p45, %p46
      %p48 = scmp.ne.s32.totalorder %s37, %s40
      %p49 = scmp.eq.s32.totalorder %s18, 1
      %p50 = por %p48, %p49
      %p51 = scmp.ne.s32.totalorder %s40, %s41
      %p52 = scmp.eq.s32.totalorder %s18, 0
      %p53 = por %p51, %p52
      %p54 = scmp.ne.s32.totalorder %s40, %s41
      %p55 = scmp.eq.s32.totalorder %s19, 1
      %p56 = por %p54, %p55
      %p58 = scmp.ne.s32.totalorder %s41, %s57
      %p59 = scmp.eq.s32.totalorder %s19, 0
      %p60 = por %p58, %p59
      %s62 = sadd.s32 %s61, 1
      %p65 = scmp.eq.s32.totalorder %s13, 1
      %p66 = scmp.ne.s32.totalorder %s61, %s63
      %p67 = scmp.eq.s32.totalorder %s13, 0
      %p68 = por %p66, %p67
      %p69 = scmp.ne.s32.totalorder %s61, %s63
      %p70 = scmp.eq.s32.totalorder %s18, 1
      %p71 = por %p69, %p70
      %p72 = scmp.ne.s32.totalorder %s63, %s64
      %p73 = scmp.eq.s32.totalorder %s18, 0
      %p74 = por %p72, %p73
      %p75 = scmp.ne.s32.totalorder %s63, %s64
      %p76 = scmp.eq.s32.totalorder %s19, 1
      %p77 = por %p75, %p76
      %p79 = scmp.ne.s32.totalorder %s64, %s78
      %p80 = scmp.eq.s32.totalorder %s19, 0
      %p81 = por %p79, %p80
      %s83 = sadd.s32 %s82, 1
      %p86 = scmp.eq.s32.totalorder %s13, 1
      %p87 = scmp.ne.s32.totalorder %s82, %s84
      %p88 = scmp.eq.s32.totalorder %s13, 0
      %p89 = por %p87, %p88
      %p90 = scmp.ne.s32.totalorder %s82, %s84
      %p91 = scmp.eq.s32.totalorder %s18, 1
      %p92 = por %p90, %p91
      %p93 = scmp.ne.s32.totalorder %s84, %s85
      %p94 = scmp.eq.s32.totalorder %s18, 0
      %p95 = por %p93, %p94
      %p96 = scmp.ne.s32.totalorder %s84, %s85
      %p97 = scmp.eq.s32.totalorder %s19, 1
      %p98 = por %p96, %p97
      %p100 = scmp.ne.s32.totalorder %s85, %s99
      %p101 = scmp.eq.s32.totalorder %s19, 0
      %p102 = por %p100, %p101
      %s103 = ssub.s32 %s21, %s28
      %p104 = scmp.eq.s32.totalorder %s103, 0
      %s106 = sadd.s32 %s105, 1
      %s107 = scalar_select %p104, %s105, %s106
      %p110 = pneg %p104
      %p111 = scmp.eq.s32.totalorder %s13, 1
      %p112 = por %p110, %p111
      %p113 = scmp.ne.s32.totalorder %s105, %s108
      %p114 = scmp.eq.s32.totalorder %s13, 0
      %p115 = por %p113, %p114
      %p116 = scmp.ne.s32.totalorder %s105, %s108
      %p117 = scmp.eq.s32.totalorder %s18, 1
      %p118 = por %p116, %p117
      %p119 = scmp.ne.s32.totalorder %s108, %s109
      %p120 = scmp.eq.s32.totalorder %s18, 0
      %p121 = por %p119, %p120
      %p122 = scmp.ne.s32.totalorder %s108, %s109
      %p123 = scmp.eq.s32.totalorder %s19, 1
      %p124 = por %p122, %p123
      %p126 = scmp.ne.s32.totalorder %s109, %s125
      %p127 = scmp.eq.s32.totalorder %s19, 0
      %p128 = por %p126, %p127
      %s129 = ssub.s32 %s20, %s32
      %s130 = ssub.s32 %s21, %s28
      %s131 = sor.u32 %s129, %s130
      %p132 = scmp.eq.s32.totalorder %s131, 0
      %s134 = sadd.s32 %s133, 1
      %s135 = scalar_select %p132, %s133, %s134
      %p138 = pneg %p132
      %p139 = scmp.eq.s32.totalorder %s13, 1
      %p140 = por %p138, %p139
      %p141 = scmp.ne.s32.totalorder %s133, %s136
      %p142 = scmp.eq.s32.totalorder %s13, 0
      %p143 = por %p141, %p142
      %p144 = scmp.ne.s32.totalorder %s133, %s136
      %p145 = scmp.eq.s32.totalorder %s18, 1
      %p146 = por %p144, %p145
      %p147 = scmp.ne.s32.totalorder %s136, %s137
      %p148 = scmp.eq.s32.totalorder %s18, 0
      %p149 = por %p147, %p148
      %p150 = scmp.ne.s32.totalorder %s136, %s137
      %p151 = scmp.eq.s32.totalorder %s19, 1
      %p152 = por %p150, %p151
      %p154 = scmp.ne.s32.totalorder %s137, %s153
      %p155 = scmp.eq.s32.totalorder %s19, 0
      %p156 = por %p154, %p155
      %p157 = scmp.le.s32.totalorder 1, %s13
      %p158 = scmp.lt.s32.totalorder %s13, 3
      %p159 = pnand %p157, %p158
      %p160 = pneg %p159
      // Predicated region
      $region9: #{tpu_custom_call.1} parent=5 // pred_check
        _
      $region10: #{tpu_custom_call.1} parent=5 // pred_check_branch
        %162 = sbr.rel (%p159) target = $region12
      $region11: #{tpu_custom_call.1} parent=5 // pred_region
        %s163 = ssub.s32 %s13, 1
        // Predicated region
        $region13: #{tpu_custom_call.1} parent=11 // pred_check
          %p164 = pneg %p74
        $region14: #{tpu_custom_call.1} parent=11 // pred_check_branch
          %166 = sbr.rel (%p164) target = $region16
        $region15: #{tpu_custom_call.1} parent=11 // pred_region
          _
        $region16: #{tpu_custom_call.1} parent=11 // pred_fallthru
          _
        // Predicated region
        $region17: #{tpu_custom_call.1} parent=11 // pred_check
          %p167 = pneg %p95
        $region18: #{tpu_custom_call.1} parent=11 // pred_check_branch
          %169 = sbr.rel (%p167) target = $region20
        $region19: #{tpu_custom_call.1} parent=11 // pred_region
          _
        $region20: #{tpu_custom_call.1} parent=11 // pred_fallthru
          _
        // Predicated region
        $region21: #{tpu_custom_call.1} parent=11 // pred_check
          %p170 = pneg %p121
        $region22: #{tpu_custom_call.1} parent=11 // pred_check_branch
          %172 = sbr.rel (%p170) target = $region24
        $region23: #{tpu_custom_call.1} parent=11 // pred_region
          %s173 = smul.u32 3, %s23
          %p174 = scmp.lt.s32.totalorder %s173, 2
          %s175 = scalar_select %p174, %s173, 2
          %s176 = smul.addr %s175, 8
          %s177 = scalar_lea.vmem %s3, %s176
          %s178 = smul.u32 3, %s23
        $region24: #{tpu_custom_call.1} parent=11 // pred_fallthru
          _
      $region12: #{tpu_custom_call.1} parent=5 // pred_fallthru
        _
      %p179 = scmp.lt.s32.totalorder %s13, 2
      // Predicated region
      $region25: #{tpu_custom_call.1} parent=5 // pred_check
        %p180 = pneg %p179
      $region26: #{tpu_custom_call.1} parent=5 // pred_check_branch
        %182 = sbr.rel (%p180) target = $region28
      $region27: #{tpu_custom_call.1} parent=5 // pred_region
        // Predicated region
        $region29: #{tpu_custom_call.1} parent=27 // pred_check
          %p183 = pneg %p47
        $region30: #{tpu_custom_call.1} parent=27 // pred_check_branch
          %185 = sbr.rel (%p183) target = $region32
        $region31: #{tpu_custom_call.1} parent=27 // pred_region
          %s186 = smul.u32 3, %s21
          %p187 = scmp.lt.s32.totalorder %s20, 1
          %s188 = scalar_select %p187, %s20, 1
          %p189 = scmp.lt.s32.totalorder %s186, 2
          %s190 = scalar_select %p189, %s186, 2
          %s191 = smul.addr %s188, 3
          %s192 = sadd.s32 %s190, %s191
          %s193 = smul.addr %s192, 4
          %s194 = scalar_lea.vmem %s0, %s193
          %s195 = smul.u32 3, %s21
        $region32: #{tpu_custom_call.1} parent=27 // pred_fallthru
          _
      $region28: #{tpu_custom_call.1} parent=5 // pred_fallthru
        _
      %p196 = scmp.le.s32.totalorder 1, %s13
      %p197 = scmp.lt.s32.totalorder %s13, 3
      %p198 = pnand %p196, %p197
      %p199 = pneg %p198
      // Predicated region
      $region33: #{tpu_custom_call.1} parent=5 // pred_check
        _
      $region34: #{tpu_custom_call.1} parent=5 // pred_check_branch
        %201 = sbr.rel (%p198) target = $region36
      $region35: #{tpu_custom_call.1} parent=5 // pred_region
        %s202 = ssub.s32 %s13, 1
        %s203 = smul.u32 3, %s23
        %p204 = scmp.lt.s32.totalorder %s22, 1
        %s205 = scalar_select %p204, %s22, 1
        %p206 = scmp.lt.s32.totalorder %s203, 2
        %s207 = scalar_select %p206, %s203, 2
        %s208 = smul.addr %s205, 3
        %s209 = sadd.s32 %s207, %s208
        %s210 = smul.addr %s209, 4
        %s211 = scalar_lea.vmem %s0, %s210
        %p212 = pneg %p53
        %p213 = pneg %p50
        %p214 = pneg %p74
        %p215 = pneg %p71
        %p216 = pneg %p95
        %p217 = pneg %p92
        %s218 = smul.u32 3, %s23
        %p219 = scmp.lt.s32.totalorder %s218, 2
        %s220 = scalar_select %p219, %s218, 2
        %s221 = smul.addr %s220, 8
        %s222 = scalar_lea.vmem %s3, %s221
        %p223 = pneg %p121
        %p224 = pneg %p118
        %p225 = pneg %p149
        %p226 = pneg %p146
        %s227 = sand.u32 %s136, 1
        %s228 = scalar_lea.sflag [#allocation3], %s227
        %s229 = sand.u32 %s136, 1
        %s230 = smul.addr %s229, 24
        %s231 = scalar_lea.vmem [#allocation2], %s230
        %s232 = smul.u32 3, %s23
        %p233 = scmp.lt.s32.totalorder %s22, 1
        %s234 = scalar_select %p233, %s22, 1
        %p235 = scmp.lt.s32.totalorder %s232, 2
        %s236 = scalar_select %p235, %s232, 2
        %s237 = smul.addr %s234, 3
        %s238 = sadd.s32 %s236, %s237
        %s239 = smul.addr %s238, 4
        %s240 = scalar_lea.vmem %s0, %s239
        %s241 = smul.u32 3, %s23
        %s242 = smul.u32 3, %s23
        %p243 = scmp.lt.s32.totalorder %s242, 2
        %s244 = scalar_select %p243, %s242, 2
        %s245 = smul.addr %s244, 8
        %s246 = scalar_lea.vmem %s3, %s245
        %s247 = smul.u32 3, %s23
        %s248 = smul.u32 3, %s23
        %v249 = vld [vmem:[%s240] sm:$0xff]
        %v250 = vld [vmem:[%s240 + $0x8] sm:$0xf]
        %v251 = vld [vmem:[%s1] sm:$0xff]
        %v252 = vld [vmem:[%s1 + $0x8] sm:$0x7]
        %v253 = vld [vmem:[%s2] sm:$0xff]
        %v254 = vld [vmem:[%s2 + $0x8] sm:$0x7]
        %256 = vset.pattern.permute.xlu0 0
        %257 = vperm.xlu0 %256, %v251
        %v258 = vpop.permute.xlu0 %257
        %261 = vset.pattern.permute.xlu0 0
        %262 = vperm.xlu0 %261, %v252
        %v263 = vpop.permute.xlu0 %262
        %v267 = vlaneseq
        %v268 = vshrl.u32 %v267, 7
        %v269 = vsub.s32 0, %v268
        %v270 = vrot.slane %v249, %v269
        %v271 = vlaneseq
        %v272 = vshrl.u32 %v271, 7
        %v273 = vsub.s32 4, %v272
        %v274 = vrot.slane %v249, %v273
        %v275 = vlaneseq
        %v276 = vshrl.u32 %v275, 7
        %v277 = vsub.s32 0, %v276
        %v278 = vrot.slane %v250, %v277
        %v282 = vlaneseq
        %v283 = vshrl.u32 %v282, 7
        %v284 = vsub.s32 0, %v283
        %v285 = vrot.slane %v270, %v284
        %v286 = vlaneseq
        %v287 = vshrl.u32 %v286, 7
        %v288 = vsub.s32 0, %v287
        %v289 = vrot.slane %v274, %v288
        %v290 = vlaneseq
        %v291 = vshrl.u32 %v290, 7
        %v292 = vsub.s32 0, %v291
        %v293 = vrot.slane %v278, %v292
        %v294 = vmul.f32 %v258, %v285
        %v295 = vmul.f32 %v258, %v289
        %v296 = vmul.f32 %v258, %v293
        %v297 = vmul.f32 %v263, %v285
        %v298 = vmul.f32 %v263, %v289
        %v299 = vmul.f32 %v263, %v293
        %301 = vset.pattern.permute.xlu0 0
        %302 = vperm.xlu0 %301, %v253
        %v303 = vpop.permute.xlu0 %302
        %306 = vset.pattern.permute.xlu0 0
        %307 = vperm.xlu0 %306, %v254
        %v308 = vpop.permute.xlu0 %307
        %v310 = vadd.f32 %v303, %v294
        %v311 = vadd.f32 %v303, %v295
        %v312 = vadd.f32 %v303, %v296
        %v313 = vadd.f32 %v308, %v297
        %v314 = vadd.f32 %v308, %v298
        %v315 = vadd.f32 %v308, %v299
        %316 = vset.pattern.permute.xlu0 1
        %317 = vperm.xlu0 %316, %v251
        %v318 = vpop.permute.xlu0 %317
        %320 = vset.pattern.permute.xlu0 1
        %321 = vperm.xlu0 %320, %v252
        %v322 = vpop.permute.xlu0 %321
        %v324 = vlaneseq
        %v325 = vshrl.u32 %v324, 7
        %v326 = vsub.s32 1, %v325
        %v327 = vrot.slane %v249, %v326
        %v328 = vlaneseq
        %v329 = vshrl.u32 %v328, 7
        %v330 = vsub.s32 5, %v329
        %v331 = vrot.slane %v249, %v330
        %v332 = vlaneseq
        %v333 = vshrl.u32 %v332, 7
        %v334 = vsub.s32 1, %v333
        %v335 = vrot.slane %v250, %v334
        %v339 = vlaneseq
        %v340 = vshrl.u32 %v339, 7
        %v341 = vsub.s32 1, %v340
        %v342 = vrot.slane %v327, %v341
        %v343 = vlaneseq
        %v344 = vshrl.u32 %v343, 7
        %v345 = vsub.s32 1, %v344
        %v346 = vrot.slane %v331, %v345
        %v347 = vlaneseq
        %v348 = vshrl.u32 %v347, 7
        %v349 = vsub.s32 1, %v348
        %v350 = vrot.slane %v335, %v349
        %v351 = vmul.f32 %v318, %v342
        %v352 = vmul.f32 %v318, %v346
        %v353 = vmul.f32 %v318, %v350
        %v354 = vmul.f32 %v322, %v342
        %v355 = vmul.f32 %v322, %v346
        %v356 = vmul.f32 %v322, %v350
        %v357 = vadd.f32 %v310, %v351
        %v358 = vadd.f32 %v311, %v352
        %v359 = vadd.f32 %v312, %v353
        %v360 = vadd.f32 %v313, %v354
        %v361 = vadd.f32 %v314, %v355
        %v362 = vadd.f32 %v315, %v356
        %363 = vset.pattern.permute.xlu0 2
        %364 = vperm.xlu0 %363, %v251
        %v365 = vpop.permute.xlu0 %364
        %367 = vset.pattern.permute.xlu0 2
        %368 = vperm.xlu0 %367, %v252
        %v369 = vpop.permute.xlu0 %368
        %v371 = vlaneseq
        %v372 = vshrl.u32 %v371, 7
        %v373 = vsub.s32 2, %v372
        %v374 = vrot.slane %v249, %v373
        %v375 = vlaneseq
        %v376 = vshrl.u32 %v375, 7
        %v377 = vsub.s32 6, %v376
        %v378 = vrot.slane %v249, %v377
        %v379 = vlaneseq
        %v380 = vshrl.u32 %v379, 7
        %v381 = vsub.s32 2, %v380
        %v382 = vrot.slane %v250, %v381
        %v386 = vlaneseq
        %v387 = vshrl.u32 %v386, 7
        %v388 = vsub.s32 2, %v387
        %v389 = vrot.slane %v374, %v388
        %v390 = vlaneseq
        %v391 = vshrl.u32 %v390, 7
        %v392 = vsub.s32 2, %v391
        %v393 = vrot.slane %v378, %v392
        %v394 = vlaneseq
        %v395 = vshrl.u32 %v394, 7
        %v396 = vsub.s32 2, %v395
        %v397 = vrot.slane %v382, %v396
        %v398 = vmul.f32 %v365, %v389
        %v399 = vmul.f32 %v365, %v393
        %v400 = vmul.f32 %v365, %v397
        %v401 = vmul.f32 %v369, %v389
        %v402 = vmul.f32 %v369, %v393
        %v403 = vmul.f32 %v369, %v397
        %v404 = vadd.f32 %v357, %v398
        %v405 = vadd.f32 %v358, %v399
        %v406 = vadd.f32 %v359, %v400
        %v407 = vadd.f32 %v360, %v401
        %v408 = vadd.f32 %v361, %v402
        %v409 = vadd.f32 %v362, %v403
        %410 = vset.pattern.permute.xlu0 3
        %411 = vperm.xlu0 %410, %v251
        %v412 = vpop.permute.xlu0 %411
        %414 = vset.pattern.permute.xlu0 3
        %415 = vperm.xlu0 %414, %v252
        %v416 = vpop.permute.xlu0 %415
        %v418 = vlaneseq
        %v419 = vshrl.u32 %v418, 7
        %v420 = vsub.s32 3, %v419
        %v421 = vrot.slane %v249, %v420
        %v422 = vlaneseq
        %v423 = vshrl.u32 %v422, 7
        %v424 = vsub.s32 7, %v423
        %v425 = vrot.slane %v249, %v424
        %v426 = vlaneseq
        %v427 = vshrl.u32 %v426, 7
        %v428 = vsub.s32 3, %v427
        %v429 = vrot.slane %v250, %v428
        %v433 = vlaneseq
        %v434 = vshrl.u32 %v433, 7
        %v435 = vsub.s32 3, %v434
        %v436 = vrot.slane %v421, %v435
        %v437 = vlaneseq
        %v438 = vshrl.u32 %v437, 7
        %v439 = vsub.s32 3, %v438
        %v440 = vrot.slane %v425, %v439
        %v441 = vlaneseq
        %v442 = vshrl.u32 %v441, 7
        %v443 = vsub.s32 3, %v442
        %v444 = vrot.slane %v429, %v443
        %v445 = vmul.f32 %v412, %v436
        %v446 = vmul.f32 %v412, %v440
        %v447 = vmul.f32 %v412, %v444
        %v448 = vmul.f32 %v416, %v436
        %v449 = vmul.f32 %v416, %v440
        %v450 = vmul.f32 %v416, %v444
        %v451 = vadd.f32 %v404, %v445
        %v452 = vadd.f32 %v405, %v446
        %v453 = vadd.f32 %v406, %v447
        %v454 = vadd.f32 %v407, %v448
        %v455 = vadd.f32 %v408, %v449
        %v456 = vadd.f32 %v409, %v450
        %v457 = vxor.u32 %v451, 2147483648
        %v458 = vxor.u32 %v452, 2147483648
        %v459 = vxor.u32 %v453, 2147483648
        %v460 = vmul.f32 %v457, 1.442695
        %v461 = vpow.pop %v460
        %v462 = vmul.f32 %v458, 1.442695
        %v463 = vpow.pop %v462
        %v464 = vmul.f32 %v459, 1.442695
        %v465 = vpow.pop %v464
        %v466 = vadd.f32 %v461, 1.0
        %v467 = vadd.f32 %v463, 1.0
        %v468 = vadd.f32 %v465, 1.0
        %v469 = vrcp.pop %v466
        %v470 = vmul.f32 1.0, %v469
        %v471 = vrcp.pop %v467
        %v472 = vmul.f32 1.0, %v471
        %v473 = vrcp.pop %v468
        %v474 = vmul.f32 1.0, %v473
        %v475 = vxor.u32 %v454, 2147483648
        %v476 = vxor.u32 %v455, 2147483648
        %v477 = vxor.u32 %v456, 2147483648
        %v478 = vmul.f32 %v475, 1.442695
        %v479 = vpow.pop %v478
        %v480 = vmul.f32 %v476, 1.442695
        %v481 = vpow.pop %v480
        %v482 = vmul.f32 %v477, 1.442695
        %v483 = vpow.pop %v482
        %v484 = vadd.f32 %v479, 1.0
        %v485 = vadd.f32 %v481, 1.0
        %v486 = vadd.f32 %v483, 1.0
        %v487 = vrcp.pop %v484
        %v488 = vmul.f32 1.0, %v487
        %v489 = vrcp.pop %v485
        %v490 = vmul.f32 1.0, %v489
        %v491 = vrcp.pop %v486
        %v492 = vmul.f32 1.0, %v491
        %v493 = vlaneseq
        %v494 = vshrl.u32 %v493, 7
        %v495 = vsub.s32 2, %v494
        %v496 = vrot.slane %v488, %v495
        %v497 = vlaneseq
        %v498 = vshrl.u32 %v497, 7
        %v499 = vsub.s32 2, %v498
        %v500 = vrot.slane %v490, %v499
        %v501 = vlaneseq
        %v502 = vshrl.u32 %v501, 7
        %v503 = vsub.s32 2, %v502
        %v504 = vrot.slane %v492, %v503
        %v505 = vmul.f32 %v470, %v496
        %v506 = vmul.f32 %v472, %v500
        %v507 = vmul.f32 %v474, %v504
        %vm508 = vcmask 1045504
        %v509 = vsel %vm508, %v505, -inf
        %v510 = vrot.slane %v509, 4
        %v511 = vmax.f32 %v509, %v510
        %v512 = vrot.slane %v511, 2
        %v513 = vmax.f32 %v511, %v512
        %v514 = vrot.slane %v513, 1
        %v515 = vmax.f32 %v513, %v514
        %v516 = vsel %vm508, %v506, -inf
        %v517 = vrot.slane %v516, 4
        %v518 = vmax.f32 %v516, %v517
        %v519 = vrot.slane %v518, 2
        %v520 = vmax.f32 %v518, %v519
        %v521 = vrot.slane %v520, 1
        %v522 = vmax.f32 %v520, %v521
        %v523 = vsel %vm508, %v507, -inf
        %v524 = vrot.slane %v523, 4
        %v525 = vmax.f32 %v523, %v524
        %v526 = vrot.slane %v525, 2
        %v527 = vmax.f32 %v525, %v526
        %v528 = vrot.slane %v527, 1
        %v529 = vmax.f32 %v527, %v528
        %v530 = vlaneseq
        %v531 = vshrl.u32 %v530, 7
        %vm532 = vcmp.eq.f32.partialorder %v505, %v515
        %vm533 = vcmp.eq.f32.partialorder %v506, %v522
        %vm534 = vcmp.eq.f32.partialorder %v507, %v529
        %v535 = vsel %vm532, %v531, 6
        %v536 = vsel %vm533, %v531, 6
        %v537 = vsel %vm534, %v531, 6
        %v538 = vsel %vm508, %v535, 2147483647
        %v539 = vrot.slane %v538, 4
        %vm540 = vcmp.lt.s32.totalorder %v538, %v539
        %v541 = vsel %vm540, %v538, %v539
        %v542 = vrot.slane %v541, 2
        %vm543 = vcmp.lt.s32.totalorder %v541, %v542
        %v544 = vsel %vm543, %v541, %v542
        %v545 = vrot.slane %v544, 1
        %vm546 = vcmp.lt.s32.totalorder %v544, %v545
        %v547 = vsel %vm546, %v544, %v545
        %v548 = vsel %vm508, %v536, 2147483647
        %v549 = vrot.slane %v548, 4
        %vm550 = vcmp.lt.s32.totalorder %v548, %v549
        %v551 = vsel %vm550, %v548, %v549
        %v552 = vrot.slane %v551, 2
        %vm553 = vcmp.lt.s32.totalorder %v551, %v552
        %v554 = vsel %vm553, %v551, %v552
        %v555 = vrot.slane %v554, 1
        %vm556 = vcmp.lt.s32.totalorder %v554, %v555
        %v557 = vsel %vm556, %v554, %v555
        %v558 = vsel %vm508, %v537, 2147483647
        %v559 = vrot.slane %v558, 4
        %vm560 = vcmp.lt.s32.totalorder %v558, %v559
        %v561 = vsel %vm560, %v558, %v559
        %v562 = vrot.slane %v561, 2
        %vm563 = vcmp.lt.s32.totalorder %v561, %v562
        %v564 = vsel %vm563, %v561, %v562
        %v565 = vrot.slane %v564, 1
        %vm566 = vcmp.lt.s32.totalorder %v564, %v565
        %v567 = vsel %vm566, %v564, %v565
        %v568 = vcvt.s32.f32 %v547
        %v569 = vcvt.s32.f32 %v557
        %v570 = vcvt.s32.f32 %v567
        %v571 = vadd.f32 %v568, 1.0
        %v572 = vadd.f32 %v569, 1.0
        %v573 = vadd.f32 %v570, 1.0
        %vm574 = vcmp.gt.f32.partialorder %v515, 0.3
        %vm575 = vcmp.gt.f32.partialorder %v522, 0.3
        %vm576 = vcmp.gt.f32.partialorder %v529, 0.3
        %v577 = vsel %vm574, %v515, 0.0
        %v578 = vsel %vm575, %v522, 0.0
        %v579 = vsel %vm576, %v529, 0.0
        %s580 = smul.u32 %s23, 384
        %v581 = vlaneseq
        %v582 = vand.u32 %v581, 127
        %v583 = vadd.s32 %v582, 128
        %v584 = vadd.s32 %v582, 256
        %v585 = vstv %s580
        %v586 = vadd.s32 %v585, %v582
        %v587 = vadd.s32 %v585, %v583
        %v588 = vadd.s32 %v585, %v584
        %vm589 = vcmp.lt.s32.totalorder %v586, 336
        %vm590 = vcmp.lt.s32.totalorder %v587, 336
        %vm591 = vcmp.lt.s32.totalorder %v588, 336
        %v592 = vsel %vm589, %v577, -1.0
        %v593 = vsel %vm590, %v578, -1.0
        %v594 = vsel %vm591, %v579, -1.0
        %v595 = vmax.f32 %v451, -4.0
        %v596 = vmax.f32 %v452, -4.0
        %v597 = vmax.f32 %v453, -4.0
        %v598 = vmax.f32 %v454, -4.0
        %v599 = vmax.f32 %v455, -4.0
        %v600 = vmax.f32 %v456, -4.0
        %v601 = vmin.f32 %v595, 4.0
        %v602 = vmin.f32 %v596, 4.0
        %v603 = vmin.f32 %v597, 4.0
        %v604 = vmin.f32 %v598, 4.0
        %v605 = vmin.f32 %v599, 4.0
        %v606 = vmin.f32 %v600, 4.0
        %v607 = vmul.f32 %v601, 1.442695
        %v608 = vpow.pop %v607
        %v609 = vmul.f32 %v602, 1.442695
        %v610 = vpow.pop %v609
        %v611 = vmul.f32 %v603, 1.442695
        %v612 = vpow.pop %v611
        %v613 = vmul.f32 %v604, 1.442695
        %v614 = vpow.pop %v613
        %v615 = vmul.f32 %v605, 1.442695
        %v616 = vpow.pop %v615
        %v617 = vmul.f32 %v606, 1.442695
        %v618 = vpow.pop %v617
        %v619 = vld [vmem:[%s246] sm:$0xf]
        %v620 = vld [vmem:[%s246 + $0x8] sm:$0xf]
        %v621 = vld [vmem:[%s246 + $0x10] sm:$0xf]
        %v622 = vld [vmem:[%s246] sm:$0xf0]
        %v623 = vld [vmem:[%s246 + $0x8] sm:$0xf0]
        %v624 = vld [vmem:[%s246 + $0x10] sm:$0xf0]
        %v631 = vrot.slane %v608, 2
        %v632 = vrot.slane %v614, 2
        %v633 = vsel %vm508, %v631, %v632
        %v634 = vrot.slane %v610, 2
        %v635 = vrot.slane %v616, 2
        %v636 = vsel %vm508, %v634, %v635
        %v637 = vrot.slane %v612, 2
        %v638 = vrot.slane %v618, 2
        %v639 = vsel %vm508, %v637, %v638
        %v643 = vmul.f32 %v622, %v633
        %v644 = vmul.f32 %v623, %v636
        %v645 = vmul.f32 %v624, %v639
        %v649 = vrot.slane %v643, 4
        %v650 = vrot.slane %v644, 4
        %v651 = vrot.slane %v645, 4
        %v655 = vadd.f32 %v619, %v649
        %v656 = vadd.f32 %v620, %v650
        %v657 = vadd.f32 %v621, %v651
        %v658 = vmax.f32 %v655, 0.0
        %v659 = vmax.f32 %v656, 0.0
        %v660 = vmax.f32 %v657, 0.0
        %v661 = vmin.f32 %v658, 127.0
        %v662 = vmin.f32 %v659, 127.0
        %v663 = vmin.f32 %v660, 127.0
        %664 = vst [vmem:[%s231] sm:$0xf] %v661
        %665 = vst [vmem:[%s231 + $0x8] sm:$0xf] %v662
        %666 = vst [vmem:[%s231 + $0x10] sm:$0xf] %v663
        %v670 = vcombine.low %v592, %v593
        %v672 = vunpack.c.l.s4 1966171168
        %v673 = vunpack.c.0.s8 %v672
        %v674 = vlaneseq
        %v675 = vshrl.u32 %v674, 7
        %v676 = vsub.s32 %v673, %v675
        %v677 = vrot.slane %v670, %v676
        %v679 = vunpack.c.l.s4 1966171168
        %v680 = vunpack.c.0.s8 %v679
        %v681 = vlaneseq
        %v682 = vshrl.u32 %v681, 7
        %v683 = vsub.s32 %v680, %v682
        %v684 = vrot.slane %v594, %v683
        %v685 = vcombine.low %v677, %v684
        %v687 = vunpack.c.l.s4 1966171168
        %v688 = vunpack.c.0.s8 %v687
        %v689 = vlaneseq
        %v690 = vshrl.u32 %v689, 7
        %v691 = vsub.s32 %v688, %v690
        %v692 = vrot.slane %v685, %v691
        %v694 = vlaneseq
        %vm695 = vcmp.ge.s32.totalorder %v694, 0
        %vm696 = vcmp.lt.s32.totalorder %v694, 384
        %vm697 = vmand %vm695, %vm696
        %s698 = scalar_lea.vmem %s231, 4 [#allocation2]
        %699 = vst.msk [vmem:[%s698] ss:$8 sm:$0x7] %vm697, %v692
        %700 = vst.msk [vmem:[%s698] ss:$8 sm:$0x0] %vm697, %v692
        %v704 = vcombine.low %v571, %v572
        %v706 = vunpack.c.l.s4 1966171168
        %v707 = vunpack.c.0.s8 %v706
        %v708 = vlaneseq
        %v709 = vshrl.u32 %v708, 7
        %v710 = vsub.s32 %v707, %v709
        %v711 = vrot.slane %v704, %v710
        %v713 = vunpack.c.l.s4 1966171168
        %v714 = vunpack.c.0.s8 %v713
        %v715 = vlaneseq
        %v716 = vshrl.u32 %v715, 7
        %v717 = vsub.s32 %v714, %v716
        %v718 = vrot.slane %v573, %v717
        %v719 = vcombine.low %v711, %v718
        %v721 = vunpack.c.l.s4 1966171168
        %v722 = vunpack.c.0.s8 %v721
        %v723 = vlaneseq
        %v724 = vshrl.u32 %v723, 7
        %v725 = vsub.s32 %v722, %v724
        %v726 = vrot.slane %v719, %v725
        %s728 = scalar_lea.vmem %s231, 5 [#allocation2]
        %729 = vst.msk [vmem:[%s728] ss:$8 sm:$0x7] %vm697, %v726
        %730 = vst.msk [vmem:[%s728] ss:$8 sm:$0x0] %vm697, %v726
        %731 = vst [vmem:[%s231] sm:$0xc0] 0.0
        %732 = vst [vmem:[%s231 + $0x8] sm:$0xc0] 0.0
        %733 = vst [vmem:[%s231 + $0x10] sm:$0xc0] 0.0
        %s734 = sand.u32 %s136, 1
        %s735 = scalar_lea.sflag [#allocation3], %s734
        %s736 = sand.u32 %s136, 1
        %s737 = smul.addr %s736, 24
        %s738 = scalar_lea.vmem [#allocation2], %s737
        // Predicated region
        $region37: #{tpu_custom_call.1} parent=35 // pred_check
          %p739 = pneg %p146
        $region38: #{tpu_custom_call.1} parent=35 // pred_check_branch
          %741 = sbr.rel (%p739) target = $region40
        $region39: #{tpu_custom_call.1} parent=35 // pred_region
          %s742 = smul.u32 3, %s23
          %s744 = ssub.s32 384, 384
          %745 = vsyncadd %s735, %s744
          %s746 = smul.addr %s22, 3
          %s747 = sadd.s32 %s742, %s746
          %s748 = smul.addr %s747, 128
          %s749 = scalar_lea.hbm %s4, %s748
          %s751 = sshll.u32 %s738, 4
          %s752 = int_to_ptr.vmem [resolvable:$true] %s751
          %754 = dma.vmem_to_hbm [thread:$0]  %s752, 384, %s749, %s735
        $region40: #{tpu_custom_call.1} parent=35 // pred_fallthru
          _
      $region36: #{tpu_custom_call.1} parent=5 // pred_fallthru
        _
      %p755 = scmp.le.s32.totalorder 2, %s13
      // Predicated region
      $region41: #{tpu_custom_call.1} parent=5 // pred_check
        %p756 = pneg %p755
      $region42: #{tpu_custom_call.1} parent=5 // pred_check_branch
        %758 = sbr.rel (%p756) target = $region44
      $region43: #{tpu_custom_call.1} parent=5 // pred_region
        %s759 = ssub.s32 %s13, 2
        // Predicated region
        $region45: #{tpu_custom_call.1} parent=43 // pred_check
          %p760 = pneg %p152
        $region46: #{tpu_custom_call.1} parent=43 // pred_check_branch
          %762 = sbr.rel (%p760) target = $region48
        $region47: #{tpu_custom_call.1} parent=43 // pred_region
          %s763 = sand.u32 %s137, 1
          %s764 = scalar_lea.sflag [#allocation3], %s763
          %s765 = sand.u32 %s137, 1
          %s766 = smul.addr %s765, 24
          %s767 = scalar_lea.vmem [#allocation2], %s766
          %768 = dma.done %s764, 384
        $region48: #{tpu_custom_call.1} parent=43 // pred_fallthru
          _
      $region44: #{tpu_custom_call.1} parent=5 // pred_fallthru
        _
    $region6: #{tpu_custom_call.1} parent=1 // loop_footer
      %s17 = sadd.s32 1, %s13
    $region7: #{tpu_custom_call.1} parent=1 // loop_footer_branch
      %12 = sbr.rel target = $region3
    $region8: #{tpu_custom_call.1} parent=1 // loop_exit
      _
    %769 = vsyncpa [#allocation3], 1
    %s770 = scalar_lea.sflag [#allocation3], 1
    %771 = vsyncpa %s770, 1

</llo_original>
